<compile_context>
chip_gen: v5e
topology: v5e:2x2
jax: 0.10.0
libtpu: 0.0.40
codegen_flags: <defaults>
</compile_context>

<pallas_src>
import functools
import math

import jax
import jax.numpy as jnp
from jax import lax
from jax.experimental import pallas as pl
from jax.experimental.pallas import tpu as pltpu


def _round_up(x, n):
    return (x + n - 1) // n * n


def _tpu_vmem_and_cores():
    """Return (per-core VMEM bytes, TensorCores per chip), conservatively."""
    try:
        info = pltpu.get_tpu_info()
        vmem = int(getattr(info, "vmem_capacity_bytes", 0))
        if vmem > 0:
            # v7x is the only generation with 64 MiB/TC VMEM, and it has 2 TCs;
            # v5e/v6e have 128 MiB and a single TC.
            return vmem, (2 if vmem <= (96 << 20) else 1)
    except Exception:
        pass
    return 64 << 20, 2  # safe fallback on every generation


def _pick_tile_c(C, D, B, w_bytes, vmem_bytes, num_tc):
    """Largest lane-aligned class tile fitting a generation-aware VMEM budget."""
    # ~40 MiB of W-tile budget on 128 MiB parts (v5e/v6e), ~21 MiB on v7x.
    budget = min(vmem_bytes // 3, 40 << 20)
    # dbl-buffered W row + dbl-buffered out column + dbl-buffered inv||w|| elem
    per_row = 2 * D * w_bytes + 2 * B * 4 + 2 * 4
    t = max(128, (budget // per_row) // 128 * 128)
    # On 2-TC parts ensure the "parallel" class axis has >= num_tc tiles so
    # both TensorCores get work (a single tile would idle one core).
    if num_tc > 1 and C > 128 * num_tc:
        t = min(t, _round_up(pl.cdiv(C, num_tc), 128))
    return C if t >= C else t


def _cosface_kernel(x_ref, w_ref, invw_ref, label_ref, out_ref, *, s, m, tile_c,
                    matmul_dtype):
    j = pl.program_id(0)  # class-tile index

    # x stays resident across all class tiles; renormalizing it here is O(B*D)
    # VPU work per tile -- negligible next to the (TILE_C, D) weight stream,
    # and avoids a pid==0-guarded scratch that would break under a "parallel"
    # class axis (the second TensorCore never sees pid 0 on v7x).
    x = x_ref[...].astype(jnp.float32)                                 # (B, D)
    xh = x * lax.rsqrt(jnp.maximum(jnp.sum(x * x, axis=-1, keepdims=True), 1e-24))

    # Raw (un-normalized-W) logits on the MXU: contract dim 1 of both operands,
    # feeding the streamed (TILE_C, D) tile directly -- no transpose, no f32
    # cast of the tile, no normalized-W copy materialized in VMEM.
    raw = lax.dot_general(
        xh.astype(matmul_dtype), w_ref[...],
        dimension_numbers=(((1,), (1,)), ((), ())),
        preferred_element_type=jnp.float32)                            # (B, TILE_C)

    # Cosine is scale-invariant per W row: L2 normalization of W becomes a
    # per-column rescale of the matmul result (inv||w|| streamed as (1, TILE_C)).
    cosine = raw * invw_ref[...]

    # Subtract margin m at each row's label column (global column index).
    col = lax.broadcasted_iota(jnp.int32, cosine.shape, 1) + j * tile_c
    out = jnp.where(col == label_ref[...], cosine - m, cosine) * s
    out_ref[...] = out.astype(out_ref.dtype)


def cosface_forward(x, weight, label, *, s=30.0, m=0.4, tile_c=None,
                    compute_dtype=jnp.bfloat16, out_dtype=jnp.float32):
    """CosFace logits: s * (normalize(x) @ normalize(W).T - m * one_hot(label)).

    x: (B, D) f32, weight: (C, D) f32, label: (B,) int -> (B, C) out_dtype.

    The HBM cost of streaming W is independent of B; callers with multiple
    (B, D) feature blocks should stack them into one call (bigger B) rather
    than invoking the kernel per micro-batch.
    """
    B, D = x.shape
    C, D2 = weight.shape
    assert D == D2
    x = x.astype(jnp.float32)
    weight_f32 = weight.astype(jnp.float32)
    label2d = label.reshape(B, 1).astype(jnp.int32)

    # Per-class inverse L2 norm (F.normalize eps=1e-12), computed once from the
    # f32 weights.  Under jit this fuses with the f32->compute_dtype cast pass
    # that already reads W once, so the Pallas kernel streams only the narrow W
    # tile plus a tiny (1, TILE_C) f32 vector (~D/2 per-mille extra traffic).
    inv_wnorm = lax.rsqrt(
        jnp.maximum(jnp.sum(weight_f32 * weight_f32, axis=1), 1e-24)).reshape(1, C)
    w_in = weight_f32.astype(compute_dtype)  # bf16 default: halves the W stream

    # Pad batch to the f32 sublane tile (8) so output stores are unmasked.
    B_pad = _round_up(B, 8)
    if B_pad != B:
        x = jnp.pad(x, ((0, B_pad - B), (0, 0)))
        label2d = jnp.pad(label2d, ((0, B_pad - B), (0, 0)), constant_values=-1)

    w_bytes = jnp.dtype(compute_dtype).itemsize
    out_bytes = jnp.dtype(out_dtype).itemsize
    vmem_bytes, num_tc = _tpu_vmem_and_cores()

    if tile_c is None:
        tile_c = _pick_tile_c(C, D, B_pad, w_bytes, vmem_bytes, num_tc)
    tile_c = int(tile_c)
    assert tile_c == C or tile_c % 128 == 0, "tile_c must be lane-aligned (x128) or == C"
    num_tiles = pl.cdiv(C, tile_c)

    # VMEM budget now accounts for in-kernel intermediates as well as the
    # double-buffered blocks, and is capped below physical VMEM per core.
    need = (2 * tile_c * D * w_bytes            # W stream (dbl-buffered)
            + 2 * tile_c * 4                    # inv||w|| stream
            + 4 * B_pad * D * 4                 # x blocks + in-kernel xh copies
            + 2 * 8 * 128 * 4                   # label blocks (padded layout)
            + 2 * B_pad * tile_c * out_bytes    # output blocks
            + 6 * B_pad * tile_c * 4            # (B, TILE_C) f32 intermediates
            + (2 << 20))                        # headroom
    vmem_limit = int(min(max(need, 32 << 20), vmem_bytes - (4 << 20)))

    kernel = functools.partial(_cosface_kernel, s=float(s), m=float(m),
                               tile_c=tile_c, matmul_dtype=compute_dtype)
    out = pl.pallas_call(
        kernel,
        out_shape=jax.ShapeDtypeStruct((B_pad, C), out_dtype),
        grid_spec=pltpu.PrefetchScalarGridSpec(
            num_scalar_prefetch=0,
            grid=(num_tiles,),
            in_specs=[
                pl.BlockSpec((B_pad, D), lambda j: (0, 0)),      # x: resident
                pl.BlockSpec((tile_c, D), lambda j: (j, 0)),     # W: streamed, dbl-buffered
                pl.BlockSpec((1, tile_c), lambda j: (0, j)),     # inv||w||: streamed
                pl.BlockSpec((B_pad, 1), lambda j: (0, 0)),      # label: resident
            ],
            out_specs=pl.BlockSpec((B_pad, tile_c), lambda j: (0, j)),  # lane-dense
        ),
        compiler_params=pltpu.CompilerParams(
            dimension_semantics=("parallel",),   # class tiles -> both TCs on v7x
            vmem_limit_bytes=vmem_limit,
        ),
    )(x, w_in, inv_wnorm, label2d)
    return out if B_pad == B else out[:B]


def _xavier_uniform(key, shape):
    # matches nn.init.xavier_uniform_ for a 2-D (out_features, in_features) tensor
    fan_out, fan_in = shape
    limit = math.sqrt(6.0 / (fan_in + fan_out))
    return jax.random.uniform(key, shape, jnp.float32, -limit, limit)


def _reference_mirror(x, weight, label, s=30.0, m=0.4, compute_dtype=jnp.float32):
    # Mirrors the kernel numerics: f32 x-normalization, matmul inputs in
    # compute_dtype with f32 accumulation, W normalization applied after the
    # matmul with f32 norms.
    xh = x * lax.rsqrt(jnp.maximum(jnp.sum(x * x, axis=1, keepdims=True), 1e-24))
    inv_w = lax.rsqrt(
        jnp.maximum(jnp.sum(weight * weight, axis=1), 1e-24)).reshape(1, -1)
    raw = lax.dot_general(
        xh.astype(compute_dtype), weight.astype(compute_dtype),
        dimension_numbers=(((1,), (1,)), ((), ())),
        preferred_element_type=jnp.float32)
    onehot = jax.nn.one_hot(label, weight.shape[0], dtype=jnp.float32)
    return s * (raw * inv_w - m * onehot)


def _reference_exact(x, weight, label, s=30.0, m=0.4):
    # Direct transcription of the PyTorch forward (all f32).
    xh = x / jnp.maximum(jnp.linalg.norm(x, axis=1, keepdims=True), 1e-12)
    wh = weight / jnp.maximum(jnp.linalg.norm(weight, axis=1, keepdims=True), 1e-12)
    cosine = xh @ wh.T
    onehot = jax.nn.one_hot(label, weight.shape[0], dtype=jnp.float32)
    return s * (cosine - m * onehot)


if __name__ == "__main__":
    B = 8
    IN_FEATURES = 128
    OUT_FEATURES = 1024

    key = jax.random.PRNGKey(0)
    kx, kw, kl = jax.random.split(key, 3)
    x = jax.random.normal(kx, (B, IN_FEATURES), dtype=jnp.float32)
    weight = _xavier_uniform(kw, (OUT_FEATURES, IN_FEATURES))
    label = jax.random.randint(kl, (B,), 0, OUT_FEATURES, dtype=jnp.int32)

    # bf16-weight fast path, auto-picked tile (single tile for this small C).
    out = jax.block_until_ready(cosface_forward(x, weight, label, s=30.0, m=0.4))
    ref_bf16 = _reference_mirror(x, weight, label, 30.0, 0.4, jnp.bfloat16)
    assert out.shape == (B, OUT_FEATURES)
    assert jnp.allclose(out, ref_bf16, atol=5e-3, rtol=5e-3), "bf16 path mismatch"

    # Explicit multi-tile path (exercises per-tile label-column offsets).
    out_tiled = jax.block_until_ready(
        cosface_forward(x, weight, label, s=30.0, m=0.4, tile_c=256))
    assert jnp.allclose(out_tiled, ref_bf16, atol=5e-3, rtol=5e-3), "tiled path mismatch"

    # f32 validation path: strict vs the mirrored reference, loose vs the exact
    # PyTorch-style reference (differences only from matmul precision).
    out32 = jax.block_until_ready(
        cosface_forward(x, weight, label, s=30.0, m=0.4, compute_dtype=jnp.float32))
    ref_f32 = _reference_mirror(x, weight, label, 30.0, 0.4, jnp.float32)
    assert jnp.allclose(out32, ref_f32, atol=1e-3, rtol=1e-3), "f32 path mismatch"
    ref_exact = _reference_exact(x, weight, label, 30.0, 0.4)
    assert jnp.allclose(out32, ref_exact, atol=3e-1, rtol=1e-2), "semantic mismatch"

    print("KERNEL_OK")
</pallas_src>

<mosaic_0001>
module attributes {stable_mosaic.version = 11 : i64} {
  func.func @_cosface_kernel(%arg0: i32, %arg1: memref<8x128xf32, #tpu.memory_space<vmem>>, %arg2: memref<512x128xbf16, #tpu.memory_space<vmem>>, %arg3: memref<1x512xf32, #tpu.memory_space<vmem>>, %arg4: memref<8x1xi32, #tpu.memory_space<vmem>>, %arg5: memref<8x512xf32, #tpu.memory_space<vmem>>) attributes {dimension_semantics = [#tpu.dimension_semantics<parallel>], iteration_bounds = array<i64: 2>, scalar_prefetch = 0 : i64, scratch_operands = 0 : i64, tpu.core_type = #tpu.core_type<tc>, window_params = [{pipeline_mode = #tpu.pipeline_mode<synchronous>, transform_indices = @transform_0, window_bounds = array<i64: 8, 128>}, {transform_indices = @transform_1, window_bounds = array<i64: 512, 128>}, {transform_indices = @transform_2, window_bounds = array<i64: 1, 512>}, {pipeline_mode = #tpu.pipeline_mode<synchronous>, transform_indices = @transform_3, window_bounds = array<i64: 8, 1>}, {transform_indices = @transform_4, window_bounds = array<i64: 8, 512>}]} {
    %c0 = arith.constant 0 : index
    %c0_0 = arith.constant 0 : index
    %0 = vector.load %arg1[%c0, %c0_0] : memref<8x128xf32, #tpu.memory_space<vmem>>, vector<8x128xf32>
    %1 = arith.mulf %0, %0 : vector<8x128xf32>
    %cst = arith.constant dense<0.000000e+00> : vector<8xf32>
    %2 = vector.multi_reduction <add>, %1, %cst [1] : vector<8x128xf32> to vector<8xf32>
    %3 = vector.shape_cast %2 : vector<8xf32> to vector<8x1xf32>
    %cst_1 = arith.constant 1.000000e-24 : f32
    %4 = vector.broadcast %cst_1 : f32 to vector<8x1xf32>
    %5 = arith.maximumf %3, %4 : vector<8x1xf32>
    %6 = math.rsqrt %5 : vector<8x1xf32>
    %7 = vector.broadcast %6 : vector<8x1xf32> to vector<8x128xf32>
    %8 = arith.mulf %0, %7 : vector<8x128xf32>
    %9 = arith.truncf %8 : vector<8x128xf32> to vector<8x128xbf16>
    %c0_2 = arith.constant 0 : index
    %c0_3 = arith.constant 0 : index
    %10 = vector.load %arg2[%c0_2, %c0_3] : memref<512x128xbf16, #tpu.memory_space<vmem>>, vector<512x128xbf16>
    %cst_4 = arith.constant dense<0.000000e+00> : vector<8x512xf32>
    %11 = tpu.matmul %9, %10, %cst_4 {dimension_numbers = #tpu.dot_dimension_numbers<[1], [1], [0], [0], [0, 0, 1, 0], [], []>} : vector<8x128xbf16>, vector<512x128xbf16>, vector<8x512xf32> -> vector<8x512xf32>
    %c0_5 = arith.constant 0 : index
    %c0_6 = arith.constant 0 : index
    %12 = vector.load %arg3[%c0_5, %c0_6] : memref<1x512xf32, #tpu.memory_space<vmem>>, vector<1x512xf32>
    %13 = vector.broadcast %12 : vector<1x512xf32> to vector<8x512xf32>
    %14 = arith.mulf %11, %13 : vector<8x512xf32>
    %15 = tpu.iota {dimensions = array<i32: 1>} : vector<8x512xi32>
    %c512_i32 = arith.constant 512 : i32
    %16 = arith.muli %arg0, %c512_i32 : i32
    %17 = vector.broadcast %16 : i32 to vector<8x512xi32>
    %18 = arith.addi %15, %17 : vector<8x512xi32>
    %c0_7 = arith.constant 0 : index
    %c0_8 = arith.constant 0 : index
    %19 = vector.load %arg4[%c0_7, %c0_8] : memref<8x1xi32, #tpu.memory_space<vmem>>, vector<8x1xi32>
    %20 = vector.broadcast %19 : vector<8x1xi32> to vector<8x512xi32>
    %21 = arith.cmpi eq, %18, %20 : vector<8x512xi32>
    %cst_9 = arith.constant 4.000000e-01 : f32
    %22 = vector.broadcast %cst_9 : f32 to vector<8x512xf32>
    %23 = arith.subf %14, %22 : vector<8x512xf32>
    %24 = arith.select %21, %23, %14 : vector<8x512xi1>, vector<8x512xf32>
    %cst_10 = arith.constant 3.000000e+01 : f32
    %25 = vector.broadcast %cst_10 : f32 to vector<8x512xf32>
    %26 = arith.mulf %24, %25 : vector<8x512xf32>
    %c0_11 = arith.constant 0 : index
    %c0_12 = arith.constant 0 : index
    %27 = vector.load %arg5[%c0_11, %c0_12] : memref<8x512xf32, #tpu.memory_space<vmem>>, vector<8x512xf32>
    tpu.vector_store %arg5[%c0_11, %c0_12], %26 {strides = array<i32>} : memref<8x512xf32, #tpu.memory_space<vmem>>, vector<8x512xf32>,
    return
  }
  func.func @transform_0(%arg0: i32) -> (i32, i32) {
    %c0_i32 = arith.constant 0 : i32
    %c0_i32_0 = arith.constant 0 : i32
    %c0_i32_1 = arith.constant 0 : i32
    return %c0_i32, %c0_i32_0 : i32, i32
  }
  func.func @transform_1(%arg0: i32) -> (i32, i32) {
    %c0_i32 = arith.constant 0 : i32
    %c0_i32_0 = arith.constant 0 : i32
    return %arg0, %c0_i32 : i32, i32
  }
  func.func @transform_2(%arg0: i32) -> (i32, i32) {
    %c0_i32 = arith.constant 0 : i32
    %c0_i32_0 = arith.constant 0 : i32
    return %c0_i32, %arg0 : i32, i32
  }
  func.func @transform_3(%arg0: i32) -> (i32, i32) {
    %c0_i32 = arith.constant 0 : i32
    %c0_i32_0 = arith.constant 0 : i32
    %c0_i32_1 = arith.constant 0 : i32
    return %c0_i32, %c0_i32_0 : i32, i32
  }
  func.func @transform_4(%arg0: i32) -> (i32, i32) {
    %c0_i32 = arith.constant 0 : i32
    %c0_i32_0 = arith.constant 0 : i32
    return %c0_i32, %arg0 : i32, i32
  }
}

</mosaic_0001>

<llo_original>
// kernel: tpu_custom_call.1
$region0: #{tpu_custom_call.1}
  #allocation0 [shape = 'u32[]', space=smem, size = 0x4, offset = 0x4, fixed_abs, tag = 'smem constant byte address 0x4 - core index']
  #allocation1 [shape = 'u32[72,128]{1,0:T(1,128)}', space=vmem, size = 0x9000, scoped, tag = 'internal scratch']
  %s0 = inlined_call_operand.vmem [shape: f32[8,128], index: 0, kind: input, shape index: {}]
  %s1 = inlined_call_operand.hbm [shape: bf16[1024,128], index: 1, kind: input, shape index: {}]
  %s2 = inlined_call_operand.hbm [shape: f32[1,1024], index: 2, kind: input, shape index: {}]
  %s3 = inlined_call_operand.vmem [shape: s32[8,1], index: 3, kind: input, shape index: {}]
  %s4 = inlined_call_operand.hbm [shape: f32[8,1024], index: 4, kind: output, shape index: {}]
  %s5 = sld [smem:[#allocation0]]
  $region57: #{tpu_custom_call.1} parent=0
    _
  %s7 = ssub.s32 1, %s5
  %s8 = scalar_select 0, %s7, %s5
  $region1: #{tpu_custom_call.1} parent=0
    #allocation2 [shape = 'u8[262144]{0}', space=vmem, size = 0x40000, scoped, tag = 'input window, operand 1']
    #allocation3 [shape = 's32[2]{0}', space=sflag, size = 0x8, scoped, tag = 'scoped memory for tpu_custom_call.1']
    #allocation4 [shape = 's32[2]{0}', space=sflag, size = 0x8, scoped, tag = 'scoped memory for tpu_custom_call.1']
    #allocation5 [shape = 'u8[4096]{0}', space=vmem, size = 0x1000, scoped, tag = 'input window, operand 2']
    #allocation6 [shape = 's32[2]{0}', space=sflag, size = 0x8, scoped, tag = 'scoped memory for tpu_custom_call.1']
    #allocation7 [shape = 'u8[32768]{0}', space=vmem, size = 0x8000, scoped, tag = 'output window, operand 0']
    %9 = vsyncpa [#allocation3], 0
    %s10 = scalar_lea.sflag [#allocation3], 1
    %11 = vsyncpa %s10, 0
    %12 = vsyncpa [#allocation6], 0
    %s13 = scalar_lea.sflag [#allocation6], 1
    %14 = vsyncpa %s13, 0
    %15 = vsyncpa [#allocation4], 0
    %s16 = scalar_lea.sflag [#allocation4], 1
    %17 = vsyncpa %s16, 0
    loop: start=0, step=1, limit=4
    $region2: #{tpu_custom_call.1} parent=1 // loop_pre_header
      _
    $region3: #{tpu_custom_call.1} parent=1 // loop_header
      %s19 = sphi 0, %s23
      %p20 = scmp.ge.s32.totalorder %s19, 4
      %s27 = sphi 0, %s27
      %s29 = sphi 0, %s27
      %s30 = sphi 0, %s29
      %s44 = sphi 0, %s30
      %s50 = sphi 0, %s52
      %s53 = sphi 0, %s50
      %s54 = sphi 0, %s53
      %s70 = sphi 0, %s54
      %s76 = sphi 0, %s78
      %s79 = sphi 0, %s76
      %s80 = sphi 0, %s79
      %s96 = sphi 0, %s80
      %s100 = sphi 0, %s100
      %s102 = sphi 0, %s100
      %s103 = sphi 0, %s102
      %s117 = sphi 0, %s103
      %s123 = sphi 0, %s125
      %s126 = sphi 0, %s123
      %s127 = sphi 0, %s126
      %s143 = sphi 0, %s127
    $region4: #{tpu_custom_call.1} parent=1 // loop_header_branch
      %22 = sbr.rel (%p20) target = $region8
    $region5: #{tpu_custom_call.1} parent=1 // loop_body
      %s24 = ssub.s32 %s19, 1
      %s25 = ssub.s32 %s19, 2
      %s26 = sadd.s32 %s19, 1
      %s28 = sadd.s32 %s27, 1
      %p31 = scmp.eq.s32.totalorder %s19, 1
      %p32 = scmp.ne.s32.totalorder %s27, %s29
      %p33 = scmp.eq.s32.totalorder %s19, 0
      %p34 = por %p32, %p33
      %p35 = scmp.ne.s32.totalorder %s27, %s29
      %p36 = scmp.eq.s32.totalorder %s24, 1
      %p37 = por %p35, %p36
      %p38 = scmp.ne.s32.totalorder %s29, %s30
      %p39 = scmp.eq.s32.totalorder %s24, 0
      %p40 = por %p38, %p39
      %p41 = scmp.ne.s32.totalorder %s29, %s30
      %p42 = scmp.eq.s32.totalorder %s25, 1
      %p43 = por %p41, %p42
      %p45 = scmp.ne.s32.totalorder %s30, %s44
      %p46 = scmp.eq.s32.totalorder %s25, 0
      %p47 = por %p45, %p46
      %s48 = ssub.s32 %s19, %s26
      %p49 = scmp.eq.s32.totalorder %s48, 0
      %s51 = sadd.s32 %s50, 1
      %s52 = scalar_select %p49, %s50, %s51
      %p55 = pneg %p49
      %p56 = scmp.eq.s32.totalorder %s19, 1
      %p57 = por %p55, %p56
      %p58 = scmp.ne.s32.totalorder %s50, %s53
      %p59 = scmp.eq.s32.totalorder %s19, 0
      %p60 = por %p58, %p59
      %p61 = scmp.ne.s32.totalorder %s50, %s53
      %p62 = scmp.eq.s32.totalorder %s24, 1
      %p63 = por %p61, %p62
      %p64 = scmp.ne.s32.totalorder %s53, %s54
      %p65 = scmp.eq.s32.totalorder %s24, 0
      %p66 = por %p64, %p65
      %p67 = scmp.ne.s32.totalorder %s53, %s54
      %p68 = scmp.eq.s32.totalorder %s25, 1
      %p69 = por %p67, %p68
      %p71 = scmp.ne.s32.totalorder %s54, %s70
      %p72 = scmp.eq.s32.totalorder %s25, 0
      %p73 = por %p71, %p72
      %s74 = ssub.s32 %s19, %s26
      %p75 = scmp.eq.s32.totalorder %s74, 0
      %s77 = sadd.s32 %s76, 1
      %s78 = scalar_select %p75, %s76, %s77
      %p81 = pneg %p75
      %p82 = scmp.eq.s32.totalorder %s19, 1
      %p83 = por %p81, %p82
      %p84 = scmp.ne.s32.totalorder %s76, %s79
      %p85 = scmp.eq.s32.totalorder %s19, 0
      %p86 = por %p84, %p85
      %p87 = scmp.ne.s32.totalorder %s76, %s79
      %p88 = scmp.eq.s32.totalorder %s24, 1
      %p89 = por %p87, %p88
      %p90 = scmp.ne.s32.totalorder %s79, %s80
      %p91 = scmp.eq.s32.totalorder %s24, 0
      %p92 = por %p90, %p91
      %p93 = scmp.ne.s32.totalorder %s79, %s80
      %p94 = scmp.eq.s32.totalorder %s25, 1
      %p95 = por %p93, %p94
      %p97 = scmp.ne.s32.totalorder %s80, %s96
      %p98 = scmp.eq.s32.totalorder %s25, 0
      %p99 = por %p97, %p98
      %s101 = sadd.s32 %s100, 1
      %p104 = scmp.eq.s32.totalorder %s19, 1
      %p105 = scmp.ne.s32.totalorder %s100, %s102
      %p106 = scmp.eq.s32.totalorder %s19, 0
      %p107 = por %p105, %p106
      %p108 = scmp.ne.s32.totalorder %s100, %s102
      %p109 = scmp.eq.s32.totalorder %s24, 1
      %p110 = por %p108, %p109
      %p111 = scmp.ne.s32.totalorder %s102, %s103
      %p112 = scmp.eq.s32.totalorder %s24, 0
      %p113 = por %p111, %p112
      %p114 = scmp.ne.s32.totalorder %s102, %s103
      %p115 = scmp.eq.s32.totalorder %s25, 1
      %p116 = por %p114, %p115
      %p118 = scmp.ne.s32.totalorder %s103, %s117
      %p119 = scmp.eq.s32.totalorder %s25, 0
      %p120 = por %p118, %p119
      %s121 = ssub.s32 %s19, %s26
      %p122 = scmp.eq.s32.totalorder %s121, 0
      %s124 = sadd.s32 %s123, 1
      %s125 = scalar_select %p122, %s123, %s124
      %p128 = pneg %p122
      %p129 = scmp.eq.s32.totalorder %s19, 1
      %p130 = por %p128, %p129
      %p131 = scmp.ne.s32.totalorder %s123, %s126
      %p132 = scmp.eq.s32.totalorder %s19, 0
      %p133 = por %p131, %p132
      %p134 = scmp.ne.s32.totalorder %s123, %s126
      %p135 = scmp.eq.s32.totalorder %s24, 1
      %p136 = por %p134, %p135
      %p137 = scmp.ne.s32.totalorder %s126, %s127
      %p138 = scmp.eq.s32.totalorder %s24, 0
      %p139 = por %p137, %p138
      %p140 = scmp.ne.s32.totalorder %s126, %s127
      %p141 = scmp.eq.s32.totalorder %s25, 1
      %p142 = por %p140, %p141
      %p144 = scmp.ne.s32.totalorder %s127, %s143
      %p145 = scmp.eq.s32.totalorder %s25, 0
      %p146 = por %p144, %p145
      %p147 = scmp.le.s32.totalorder 1, %s19
      %p148 = scmp.lt.s32.totalorder %s19, 3
      %p149 = pnand %p147, %p148
      %p150 = pneg %p149
      // Predicated region
      $region9: #{tpu_custom_call.1} parent=5 // pred_check
        _
      $region10: #{tpu_custom_call.1} parent=5 // pred_check_branch
        %152 = sbr.rel (%p149) target = $region12
      $region11: #{tpu_custom_call.1} parent=5 // pred_region
        %s153 = ssub.s32 %s19, 1
        // Predicated region
        $region13: #{tpu_custom_call.1} parent=11 // pred_check
          %p154 = pneg %p40
        $region14: #{tpu_custom_call.1} parent=11 // pred_check_branch
          %156 = sbr.rel (%p154) target = $region16
        $region15: #{tpu_custom_call.1} parent=11 // pred_region
          _
        $region16: #{tpu_custom_call.1} parent=11 // pred_fallthru
          _
        // Predicated region
        $region17: #{tpu_custom_call.1} parent=11 // pred_check
          %p157 = pneg %p113
        $region18: #{tpu_custom_call.1} parent=11 // pred_check_branch
          %159 = sbr.rel (%p157) target = $region20
        $region19: #{tpu_custom_call.1} parent=11 // pred_region
          _
        $region20: #{tpu_custom_call.1} parent=11 // pred_fallthru
          _
      $region12: #{tpu_custom_call.1} parent=5 // pred_fallthru
        _
      %p160 = scmp.lt.s32.totalorder %s19, 2
      // Predicated region
      $region21: #{tpu_custom_call.1} parent=5 // pred_check
        %p161 = pneg %p160
      $region22: #{tpu_custom_call.1} parent=5 // pred_check_branch
        %163 = sbr.rel (%p161) target = $region24
      $region23: #{tpu_custom_call.1} parent=5 // pred_region
        // Predicated region
        $region25: #{tpu_custom_call.1} parent=23 // pred_check
          %p164 = pneg %p60
        $region26: #{tpu_custom_call.1} parent=23 // pred_check_branch
          %166 = sbr.rel (%p164) target = $region28
        $region27: #{tpu_custom_call.1} parent=23 // pred_region
          %s167 = sand.u32 %s50, 1
          %s168 = scalar_lea.sflag [#allocation3], %s167
          %s169 = sand.u32 %s50, 1
          %s170 = smul.addr %s169, 256
          %s171 = scalar_lea.vmem [#allocation2], %s170
          %s172 = smul.u32 64, %s19
          %174 = vsyncadd %s168, 0
          %s175 = smul.addr %s172, 4
          %s176 = scalar_lea.hbm %s1, %s175
          %s177 = sshll.u32 %s176, 4
          %s178 = int_to_ptr.hbm [resolvable:$true] %s177
          %s179 = sshll.u32 %s171, 4
          %s180 = int_to_ptr.vmem [resolvable:$true] %s179
          %185 = dma.hbm_to_vmem [thread:$0]  %s178, 4096, %s180, %s168, 64, 64, 4
        $region28: #{tpu_custom_call.1} parent=23 // pred_fallthru
          _
        // Predicated region
        $region29: #{tpu_custom_call.1} parent=23 // pred_check
          %p186 = pneg %p86
        $region30: #{tpu_custom_call.1} parent=23 // pred_check_branch
          %188 = sbr.rel (%p186) target = $region32
        $region31: #{tpu_custom_call.1} parent=23 // pred_region
          %s189 = sand.u32 %s76, 1
          %s190 = scalar_lea.sflag [#allocation6], %s189
          %s191 = sand.u32 %s76, 1
          %s192 = smul.addr %s191, 4
          %s193 = scalar_lea.vmem [#allocation5], %s192
          %s194 = smul.u32 4, %s19
          %196 = vsyncadd %s190, 0
          %s197 = scalar_lea.hbm %s2, %s194
          %s199 = sshll.u32 %s197, 4
          %s200 = int_to_ptr.hbm [resolvable:$true] %s199
          %s201 = sshll.u32 %s193, 4
          %s202 = int_to_ptr.vmem [resolvable:$true] %s201
          %204 = dma.hbm_to_vmem [thread:$0]  %s200, 64, %s202, %s190
        $region32: #{tpu_custom_call.1} parent=23 // pred_fallthru
          _
      $region24: #{tpu_custom_call.1} parent=5 // pred_fallthru
        _
      %p205 = scmp.le.s32.totalorder 1, %s19
      %p206 = scmp.lt.s32.totalorder %s19, 3
      %p207 = pnand %p205, %p206
      %p208 = pneg %p207
      // Predicated region
      $region33: #{tpu_custom_call.1} parent=5 // pred_check
        _
      $region34: #{tpu_custom_call.1} parent=5 // pred_check_branch
        %210 = sbr.rel (%p207) target = $region36
      $region35: #{tpu_custom_call.1} parent=5 // pred_region
        %s211 = ssub.s32 %s19, 1
        %s212 = sand.u32 %s53, 1
        %s213 = scalar_lea.sflag [#allocation3], %s212
        %s214 = sand.u32 %s53, 1
        %s215 = smul.addr %s214, 256
        %s216 = scalar_lea.vmem [#allocation2], %s215
        // Predicated region
        $region37: #{tpu_custom_call.1} parent=35 // pred_check
          %p217 = pneg %p66
        $region38: #{tpu_custom_call.1} parent=35 // pred_check_branch
          %219 = sbr.rel (%p217) target = $region40
        $region39: #{tpu_custom_call.1} parent=35 // pred_region
          %221 = dma.done %s213, 4096
        $region40: #{tpu_custom_call.1} parent=35 // pred_fallthru
          _
        %s222 = sand.u32 %s79, 1
        %s223 = scalar_lea.sflag [#allocation6], %s222
        %s224 = sand.u32 %s79, 1
        %s225 = smul.addr %s224, 4
        %s226 = scalar_lea.vmem [#allocation5], %s225
        // Predicated region
        $region41: #{tpu_custom_call.1} parent=35 // pred_check
          %p227 = pneg %p92
        $region42: #{tpu_custom_call.1} parent=35 // pred_check_branch
          %229 = sbr.rel (%p227) target = $region44
        $region43: #{tpu_custom_call.1} parent=35 // pred_region
          %231 = dma.done %s223, 64
        $region44: #{tpu_custom_call.1} parent=35 // pred_fallthru
          _
        %p232 = pneg %p40
        %p233 = pneg %p37
        %s234 = sand.u32 %s53, 1
        %s235 = scalar_lea.sflag [#allocation3], %s234
        %s236 = sand.u32 %s53, 1
        %s237 = smul.addr %s236, 256
        %s238 = scalar_lea.vmem [#allocation2], %s237
        %p239 = pneg %p66
        %p240 = pneg %p63
        %s241 = sand.u32 %s79, 1
        %s242 = scalar_lea.sflag [#allocation6], %s241
        %s243 = sand.u32 %s79, 1
        %s244 = smul.addr %s243, 4
        %s245 = scalar_lea.vmem [#allocation5], %s244
        %p246 = pneg %p92
        %p247 = pneg %p89
        %p248 = pneg %p113
        %p249 = pneg %p110
        %p250 = pneg %p139
        %p251 = pneg %p136
        %s252 = sand.u32 %s126, 1
        %s253 = scalar_lea.sflag [#allocation4], %s252
        %s254 = sand.u32 %s126, 1
        %s255 = smul.addr %s254, 32
        %s256 = scalar_lea.vmem [#allocation7], %s255
        %s257 = smul.u32 64, %s24
        %s258 = smul.u32 4, %s24
        %s259 = smul.u32 4, %s24
        %v260 = vld [vmem:[%s0] sm:$0xff]
        %v261 = vmul.f32 %v260, %v260
        %262 = vadd.xlane.f32.xlu0 %v261
        %v263 = vpop.xlane.xlu0 %262
        %v264 = vmax.f32 %v263, 1e-24
        %v265 = vrsqrt.pop %v264
        %v266 = vmul.f32 %v265, %v264
        %v267 = vmul.f32 %v266, %v265
        %v268 = vmul.f32 0.5, %v267
        %v269 = vsub.f32 1.5, %v268
        %v270 = vmul.f32 %v265, %v269
        %vm271 = vweird.f32 %v264
        %vm272 = vweird.f32 %v265
        %vm273 = vmor %vm271, %vm272
        %v274 = vsel %vm273, %v265, %v270
        %v275 = vmul.f32 %v260, %v274
        %v276 = vpack.c.bf16 %v275, %v275
        %v277 = vld [vmem:[%s216] sm:$0xf]
        %v278 = vld [vmem:[%s216 + $0x4] sm:$0xf]
        %v279 = vld [vmem:[%s216 + $0x8] sm:$0xf]
        %v280 = vld [vmem:[%s216 + $0xc] sm:$0xf]
        %v281 = vld [vmem:[%s216 + $0x10] sm:$0xf]
        %v282 = vld [vmem:[%s216 + $0x14] sm:$0xf]
        %v283 = vld [vmem:[%s216 + $0x18] sm:$0xf]
        %v284 = vld [vmem:[%s216 + $0x1c] sm:$0xf]
        %v285 = vld [vmem:[%s216 + $0x20] sm:$0xf]
        %v286 = vld [vmem:[%s216 + $0x24] sm:$0xf]
        %v287 = vld [vmem:[%s216 + $0x28] sm:$0xf]
        %v288 = vld [vmem:[%s216 + $0x2c] sm:$0xf]
        %v289 = vld [vmem:[%s216 + $0x30] sm:$0xf]
        %v290 = vld [vmem:[%s216 + $0x34] sm:$0xf]
        %v291 = vld [vmem:[%s216 + $0x38] sm:$0xf]
        %v292 = vld [vmem:[%s216 + $0x3c] sm:$0xf]
        %v293 = vld [vmem:[%s216 + $0x40] sm:$0xf]
        %v294 = vld [vmem:[%s216 + $0x44] sm:$0xf]
        %v295 = vld [vmem:[%s216 + $0x48] sm:$0xf]
        %v296 = vld [vmem:[%s216 + $0x4c] sm:$0xf]
        %v297 = vld [vmem:[%s216 + $0x50] sm:$0xf]
        %v298 = vld [vmem:[%s216 + $0x54] sm:$0xf]
        %v299 = vld [vmem:[%s216 + $0x58] sm:$0xf]
        %v300 = vld [vmem:[%s216 + $0x5c] sm:$0xf]
        %v301 = vld [vmem:[%s216 + $0x60] sm:$0xf]
        %v302 = vld [vmem:[%s216 + $0x64] sm:$0xf]
        %v303 = vld [vmem:[%s216 + $0x68] sm:$0xf]
        %v304 = vld [vmem:[%s216 + $0x6c] sm:$0xf]
        %v305 = vld [vmem:[%s216 + $0x70] sm:$0xf]
        %v306 = vld [vmem:[%s216 + $0x74] sm:$0xf]
        %v307 = vld [vmem:[%s216 + $0x78] sm:$0xf]
        %v308 = vld [vmem:[%s216 + $0x7c] sm:$0xf]
        %v309 = vld [vmem:[%s216 + $0x80] sm:$0xf]
        %v310 = vld [vmem:[%s216 + $0x84] sm:$0xf]
        %v311 = vld [vmem:[%s216 + $0x88] sm:$0xf]
        %v312 = vld [vmem:[%s216 + $0x8c] sm:$0xf]
        %v313 = vld [vmem:[%s216 + $0x90] sm:$0xf]
        %v314 = vld [vmem:[%s216 + $0x94] sm:$0xf]
        %v315 = vld [vmem:[%s216 + $0x98] sm:$0xf]
        %v316 = vld [vmem:[%s216 + $0x9c] sm:$0xf]
        %v317 = vld [vmem:[%s216 + $0xa0] sm:$0xf]
        %v318 = vld [vmem:[%s216 + $0xa4] sm:$0xf]
        %v319 = vld [vmem:[%s216 + $0xa8] sm:$0xf]
        %v320 = vld [vmem:[%s216 + $0xac] sm:$0xf]
        %v321 = vld [vmem:[%s216 + $0xb0] sm:$0xf]
        %v322 = vld [vmem:[%s216 + $0xb4] sm:$0xf]
        %v323 = vld [vmem:[%s216 + $0xb8] sm:$0xf]
        %v324 = vld [vmem:[%s216 + $0xbc] sm:$0xf]
        %v325 = vld [vmem:[%s216 + $0xc0] sm:$0xf]
        %v326 = vld [vmem:[%s216 + $0xc4] sm:$0xf]
        %v327 = vld [vmem:[%s216 + $0xc8] sm:$0xf]
        %v328 = vld [vmem:[%s216 + $0xcc] sm:$0xf]
        %v329 = vld [vmem:[%s216 + $0xd0] sm:$0xf]
        %v330 = vld [vmem:[%s216 + $0xd4] sm:$0xf]
        %v331 = vld [vmem:[%s216 + $0xd8] sm:$0xf]
        %v332 = vld [vmem:[%s216 + $0xdc] sm:$0xf]
        %v333 = vld [vmem:[%s216 + $0xe0] sm:$0xf]
        %v334 = vld [vmem:[%s216 + $0xe4] sm:$0xf]
        %v335 = vld [vmem:[%s216 + $0xe8] sm:$0xf]
        %v336 = vld [vmem:[%s216 + $0xec] sm:$0xf]
        %v337 = vld [vmem:[%s216 + $0xf0] sm:$0xf]
        %v338 = vld [vmem:[%s216 + $0xf4] sm:$0xf]
        %v339 = vld [vmem:[%s216 + $0xf8] sm:$0xf]
        %v340 = vld [vmem:[%s216 + $0xfc] sm:$0xf]
        %v405 = vunpack.c.l.b16 %v277
        %v406 = vunpack.c.l.b16 %v278
        %v407 = vunpack.c.l.b16 %v279
        %v408 = vunpack.c.l.b16 %v280
        %v409 = vunpack.c.l.b16 %v281
        %v410 = vunpack.c.l.b16 %v282
        %v411 = vunpack.c.l.b16 %v283
        %v412 = vunpack.c.l.b16 %v284
        %v413 = vunpack.c.l.b16 %v285
        %v414 = vunpack.c.l.b16 %v286
        %v415 = vunpack.c.l.b16 %v287
        %v416 = vunpack.c.l.b16 %v288
        %v417 = vunpack.c.l.b16 %v289
        %v418 = vunpack.c.l.b16 %v290
        %v419 = vunpack.c.l.b16 %v291
        %v420 = vunpack.c.l.b16 %v292
        %v421 = vunpack.c.l.b16 %v293
        %v422 = vunpack.c.l.b16 %v294
        %v423 = vunpack.c.l.b16 %v295
        %v424 = vunpack.c.l.b16 %v296
        %v425 = vunpack.c.l.b16 %v297
        %v426 = vunpack.c.l.b16 %v298
        %v427 = vunpack.c.l.b16 %v299
        %v428 = vunpack.c.l.b16 %v300
        %v429 = vunpack.c.l.b16 %v301
        %v430 = vunpack.c.l.b16 %v302
        %v431 = vunpack.c.l.b16 %v303
        %v432 = vunpack.c.l.b16 %v304
        %v433 = vunpack.c.l.b16 %v305
        %v434 = vunpack.c.l.b16 %v306
        %v435 = vunpack.c.l.b16 %v307
        %v436 = vunpack.c.l.b16 %v308
        %v437 = vunpack.c.l.b16 %v309
        %v438 = vunpack.c.l.b16 %v310
        %v439 = vunpack.c.l.b16 %v311
        %v440 = vunpack.c.l.b16 %v312
        %v441 = vunpack.c.l.b16 %v313
        %v442 = vunpack.c.l.b16 %v314
        %v443 = vunpack.c.l.b16 %v315
        %v444 = vunpack.c.l.b16 %v316
        %v445 = vunpack.c.l.b16 %v317
        %v446 = vunpack.c.l.b16 %v318
        %v447 = vunpack.c.l.b16 %v319
        %v448 = vunpack.c.l.b16 %v320
        %v449 = vunpack.c.l.b16 %v321
        %v450 = vunpack.c.l.b16 %v322
        %v451 = vunpack.c.l.b16 %v323
        %v452 = vunpack.c.l.b16 %v324
        %v453 = vunpack.c.l.b16 %v325
        %v454 = vunpack.c.l.b16 %v326
        %v455 = vunpack.c.l.b16 %v327
        %v456 = vunpack.c.l.b16 %v328
        %v457 = vunpack.c.l.b16 %v329
        %v458 = vunpack.c.l.b16 %v330
        %v459 = vunpack.c.l.b16 %v331
        %v460 = vunpack.c.l.b16 %v332
        %v461 = vunpack.c.l.b16 %v333
        %v462 = vunpack.c.l.b16 %v334
        %v463 = vunpack.c.l.b16 %v335
        %v464 = vunpack.c.l.b16 %v336
        %v465 = vunpack.c.l.b16 %v337
        %v466 = vunpack.c.l.b16 %v338
        %v467 = vunpack.c.l.b16 %v339
        %v468 = vunpack.c.l.b16 %v340
        %v469 = vpack.c.b16 %v406, %v405
        %v470 = vpack.c.b16 %v408, %v407
        %v471 = vpack.c.b16 %v410, %v409
        %v472 = vpack.c.b16 %v412, %v411
        %v473 = vpack.c.b16 %v414, %v413
        %v474 = vpack.c.b16 %v416, %v415
        %v475 = vpack.c.b16 %v418, %v417
        %v476 = vpack.c.b16 %v420, %v419
        %v477 = vpack.c.b16 %v422, %v421
        %v478 = vpack.c.b16 %v424, %v423
        %v479 = vpack.c.b16 %v426, %v425
        %v480 = vpack.c.b16 %v428, %v427
        %v481 = vpack.c.b16 %v430, %v429
        %v482 = vpack.c.b16 %v432, %v431
        %v483 = vpack.c.b16 %v434, %v433
        %v484 = vpack.c.b16 %v436, %v435
        %v485 = vpack.c.b16 %v438, %v437
        %v486 = vpack.c.b16 %v440, %v439
        %v487 = vpack.c.b16 %v442, %v441
        %v488 = vpack.c.b16 %v444, %v443
        %v489 = vpack.c.b16 %v446, %v445
        %v490 = vpack.c.b16 %v448, %v447
        %v491 = vpack.c.b16 %v450, %v449
        %v492 = vpack.c.b16 %v452, %v451
        %v493 = vpack.c.b16 %v454, %v453
        %v494 = vpack.c.b16 %v456, %v455
        %v495 = vpack.c.b16 %v458, %v457
        %v496 = vpack.c.b16 %v460, %v459
        %v497 = vpack.c.b16 %v462, %v461
        %v498 = vpack.c.b16 %v464, %v463
        %v499 = vpack.c.b16 %v466, %v465
        %v500 = vpack.c.b16 %v468, %v467
        %533 = vmatpush.bf16.xpose.msra.mxu0 %v476
        %534 = vmatpush.bf16.xpose.msra.mxu0 %v475
        %535 = vmatpush.bf16.xpose.msra.mxu0 %v474
        %536 = vmatpush.bf16.xpose.msra.mxu0 %v473
        %537 = vmatpush.bf16.xpose.msra.mxu0 %v472
        %538 = vmatpush.bf16.xpose.msra.mxu0 %v471
        %539 = vmatpush.bf16.xpose.msra.mxu0 %v470
        %540 = vmatpush.bf16.xpose.msra.mxu0 %v469
        %541 = vmatmul.bf16.gmra.mxu0 %v276
        %v542 = vpop.f32.mrf.mxu0
        %v543 = vadd.f32 0.0, %v542
        %v544 = vpop.f32.mrf.mxu0
        %545 = vdwg.mxu0
        %546 = vmatpush.bf16.xpose.msra.mxu0 %v484
        %547 = vmatpush.bf16.xpose.msra.mxu0 %v483
        %548 = vmatpush.bf16.xpose.msra.mxu0 %v482
        %549 = vmatpush.bf16.xpose.msra.mxu0 %v481
        %550 = vmatpush.bf16.xpose.msra.mxu0 %v480
        %551 = vmatpush.bf16.xpose.msra.mxu0 %v479
        %552 = vmatpush.bf16.xpose.msra.mxu0 %v478
        %553 = vmatpush.bf16.xpose.msra.mxu0 %v477
        %554 = vmatmul.bf16.gmra.mxu0 %v276
        %v555 = vpop.f32.mrf.mxu0
        %v556 = vadd.f32 0.0, %v555
        %v557 = vpop.f32.mrf.mxu0
        %558 = vdwg.mxu0
        %559 = vmatpush.bf16.xpose.msra.mxu0 %v492
        %560 = vmatpush.bf16.xpose.msra.mxu0 %v491
        %561 = vmatpush.bf16.xpose.msra.mxu0 %v490
        %562 = vmatpush.bf16.xpose.msra.mxu0 %v489
        %563 = vmatpush.bf16.xpose.msra.mxu0 %v488
        %564 = vmatpush.bf16.xpose.msra.mxu0 %v487
        %565 = vmatpush.bf16.xpose.msra.mxu0 %v486
        %566 = vmatpush.bf16.xpose.msra.mxu0 %v485
        %567 = vmatmul.bf16.gmra.mxu0 %v276
        %v568 = vpop.f32.mrf.mxu0
        %v569 = vadd.f32 0.0, %v568
        %v570 = vpop.f32.mrf.mxu0
        %571 = vdwg.mxu0
        %572 = vmatpush.bf16.xpose.msra.mxu0 %v500
        %573 = vmatpush.bf16.xpose.msra.mxu0 %v499
        %574 = vmatpush.bf16.xpose.msra.mxu0 %v498
        %575 = vmatpush.bf16.xpose.msra.mxu0 %v497
        %576 = vmatpush.bf16.xpose.msra.mxu0 %v496
        %577 = vmatpush.bf16.xpose.msra.mxu0 %v495
        %578 = vmatpush.bf16.xpose.msra.mxu0 %v494
        %579 = vmatpush.bf16.xpose.msra.mxu0 %v493
        %580 = vmatmul.bf16.gmra.mxu0 %v276
        %v581 = vpop.f32.mrf.mxu0
        %v582 = vadd.f32 0.0, %v581
        %v583 = vpop.f32.mrf.mxu0
        %584 = vdwg.mxu0
        %v585 = vld [vmem:[%s226] sm:$0xf]
        %v587 = vperm.slane %v585, 0
        %v588 = vperm.slane %v585, 1
        %v589 = vperm.slane %v585, 2
        %v590 = vperm.slane %v585, 3
        %v595 = vmul.f32 %v543, %v587
        %v596 = vmul.f32 %v556, %v588
        %v597 = vmul.f32 %v569, %v589
        %v598 = vmul.f32 %v582, %v590
        %v599 = vlaneseq
        %v600 = vand.u32 %v599, 127
        %v601 = vadd.s32 %v600, 128
        %v602 = vadd.s32 %v600, 256
        %v603 = vadd.s32 %v600, 384
        %s604 = smul.u32 %s24, 512
        %v605 = vstv %s604
        %v606 = vadd.s32 %v600, %v605
        %v607 = vadd.s32 %v601, %v605
        %v608 = vadd.s32 %v602, %v605
        %v609 = vadd.s32 %v603, %v605
        %v610 = vld [vmem:[%s3] sm:$0xff]
        %611 = vset.pattern.permute.xlu0 0
        %612 = vperm.xlu0 %611, %v610
        %v613 = vpop.permute.xlu0 %612
        %vm614 = vcmp.eq.s32.totalorder %v606, %v613
        %vm615 = vcmp.eq.s32.totalorder %v607, %v613
        %vm616 = vcmp.eq.s32.totalorder %v608, %v613
        %vm617 = vcmp.eq.s32.totalorder %v609, %v613
        %v618 = vsub.f32 %v595, 0.4
        %v619 = vsub.f32 %v596, 0.4
        %v620 = vsub.f32 %v597, 0.4
        %v621 = vsub.f32 %v598, 0.4
        %v622 = vsel %vm614, %v618, %v595
        %v623 = vsel %vm615, %v619, %v596
        %v624 = vsel %vm616, %v620, %v597
        %v625 = vsel %vm617, %v621, %v598
        %v626 = vmul.f32 %v622, 30.0
        %v627 = vmul.f32 %v623, 30.0
        %v628 = vmul.f32 %v624, 30.0
        %v629 = vmul.f32 %v625, 30.0
        %630 = vst [vmem:[%s256] sm:$0xff] %v626
        %631 = vst [vmem:[%s256 + $0x8] sm:$0xff] %v627
        %632 = vst [vmem:[%s256 + $0x10] sm:$0xff] %v628
        %633 = vst [vmem:[%s256 + $0x18] sm:$0xff] %v629
        %s634 = sand.u32 %s126, 1
        %s635 = scalar_lea.sflag [#allocation4], %s634
        %s636 = sand.u32 %s126, 1
        %s637 = smul.addr %s636, 32
        %s638 = scalar_lea.vmem [#allocation7], %s637
        // Predicated region
        $region45: #{tpu_custom_call.1} parent=35 // pred_check
          %p639 = pneg %p136
        $region46: #{tpu_custom_call.1} parent=35 // pred_check_branch
          %641 = sbr.rel (%p639) target = $region48
        $region47: #{tpu_custom_call.1} parent=35 // pred_region
          %s642 = smul.u32 4, %s24
          %644 = vsyncadd %s635, 0
          %s645 = smul.addr %s642, 8
          %s646 = scalar_lea.hbm %s4, %s645
          %s648 = sshll.u32 %s638, 4
          %s649 = int_to_ptr.vmem [resolvable:$true] %s648
          %s650 = sshll.u32 %s646, 4
          %s651 = int_to_ptr.hbm [resolvable:$true] %s650
          %653 = dma.vmem_to_hbm [thread:$0]  %s649, 512, %s651, %s635
        $region48: #{tpu_custom_call.1} parent=35 // pred_fallthru
          _
      $region36: #{tpu_custom_call.1} parent=5 // pred_fallthru
        _
      %p654 = scmp.le.s32.totalorder 2, %s19
      // Predicated region
      $region49: #{tpu_custom_call.1} parent=5 // pred_check
        %p655 = pneg %p654
      $region50: #{tpu_custom_call.1} parent=5 // pred_check_branch
        %657 = sbr.rel (%p655) target = $region52
      $region51: #{tpu_custom_call.1} parent=5 // pred_region
        %s658 = ssub.s32 %s19, 2
        // Predicated region
        $region53: #{tpu_custom_call.1} parent=51 // pred_check
          %p659 = pneg %p142
        $region54: #{tpu_custom_call.1} parent=51 // pred_check_branch
          %661 = sbr.rel (%p659) target = $region56
        $region55: #{tpu_custom_call.1} parent=51 // pred_region
          %s662 = sand.u32 %s127, 1
          %s663 = scalar_lea.sflag [#allocation4], %s662
          %s664 = sand.u32 %s127, 1
          %s665 = smul.addr %s664, 32
          %s666 = scalar_lea.vmem [#allocation7], %s665
          %668 = dma.done %s663, 512
        $region56: #{tpu_custom_call.1} parent=51 // pred_fallthru
          _
      $region52: #{tpu_custom_call.1} parent=5 // pred_fallthru
        _
    $region6: #{tpu_custom_call.1} parent=1 // loop_footer
      %s23 = sadd.s32 1, %s19
    $region7: #{tpu_custom_call.1} parent=1 // loop_footer_branch
      %18 = sbr.rel target = $region3
    $region8: #{tpu_custom_call.1} parent=1 // loop_exit
      _
    %669 = vsyncpa [#allocation3], 1
    %s670 = scalar_lea.sflag [#allocation3], 1
    %671 = vsyncpa %s670, 1
    %672 = vsyncpa [#allocation6], 1
    %s673 = scalar_lea.sflag [#allocation6], 1
    %674 = vsyncpa %s673, 1
    %675 = vsyncpa [#allocation4], 1
    %s676 = scalar_lea.sflag [#allocation4], 1
    %677 = vsyncpa %s676, 1

</llo_original>
